<compile_context>
chip_gen: v5e
topology: v5e:2x2
jax: 0.10.0
libtpu: 0.0.40
codegen_flags: <defaults>
</compile_context>

<pallas_src>
import jax
import jax.numpy as jnp
from jax import lax
from jax.experimental import pallas as pl
from jax.experimental.pallas import tpu as pltpu


def _choose_tiles(N, C, dtype_bytes, budget_bytes=4 * 1024 * 1024):
    """Pick (TM, TC) so one logits tile is ~a few MiB and (8,128)-legal."""
    # Column tile: keep the full class axis unless even 8 rows would blow the
    # budget (vocab-scale C), in which case tile C in multiples of 128.
    if C * 8 * dtype_bytes <= budget_bytes:
        TC = C                      # equals full dim -> always legal
    else:
        TC = min(C, 2048)           # multiple of 128
    rows_budget = max(8, (budget_bytes // (TC * dtype_bytes)) // 8 * 8)
    TM_cap = min(1024, rows_budget)
    TM = N if N <= TM_cap else TM_cap   # full dim, or a multiple of 8
    return TM, TC


def _make_ce_kernel(TM, TC, C):
    need_col_mask = (C % TC) != 0

    def kernel(pred_ref, tgt_ref, out_ref, m_ref, l_ref, t_ref):
        # pred_ref: (TM, TC) logits        tgt_ref: (TM, 1) int32
        # out_ref : (TM, 1) per-row NLL    m/l/t  : (TM, 1) f32 scratch
        j = pl.program_id(1)
        nj = pl.num_programs(1)

        @pl.when(j == 0)
        def _init():
            m_ref[...] = jnp.full(m_ref.shape, -jnp.inf, jnp.float32)
            l_ref[...] = jnp.zeros(l_ref.shape, jnp.float32)
            t_ref[...] = jnp.zeros(t_ref.shape, jnp.float32)

        logits = pred_ref[...].astype(jnp.float32)                 # (TM, TC)
        tgt = tgt_ref[...]                                         # (TM, 1)
        col_ids = j * TC + lax.broadcasted_iota(jnp.int32, logits.shape, 1)

        if need_col_mask:
            # Padded class columns in the last column block must not pollute
            # the row max / exp-sum.
            logits = jnp.where(col_ids < C, logits, -jnp.inf)

        # Online (rescaled) log-sum-exp across column blocks.
        blk_max = jnp.max(logits, axis=-1, keepdims=True)          # (TM, 1)
        m_prev = m_ref[...]
        m_new = jnp.maximum(m_prev, blk_max)
        scale = jnp.exp(m_prev - m_new)
        l_ref[...] = l_ref[...] * scale + jnp.sum(
            jnp.exp(logits - m_new), axis=-1, keepdims=True)
        m_ref[...] = m_new

        # Target logit: hits in at most one column block; masked select avoids
        # a full one-hot temporary + extra multiply.
        t_ref[...] += jnp.sum(
            jnp.where(col_ids == tgt, logits, 0.0), axis=-1, keepdims=True)

        @pl.when(j == nj - 1)
        def _finalize():
            # per-row negative log-likelihood: lse - target_logit
            out_ref[...] = jnp.log(l_ref[...]) + m_ref[...] - t_ref[...]

    return kernel


def ce_loss(prediction, target):
    """Cross-entropy loss with mean reduction (matches nn.CrossEntropyLoss)."""
    # Match the PyTorch module: squeeze target dim 1 if it is 2-D.
    if target.ndim != 1:
        target = jnp.squeeze(target, axis=1)
    N, C = prediction.shape
    tgt2d = target.astype(jnp.int32).reshape(N, 1)

    dtype_bytes = jnp.dtype(prediction.dtype).itemsize
    TM, TC = _choose_tiles(N, C, dtype_bytes)
    grid = (pl.cdiv(N, TM), pl.cdiv(C, TC))

    nll = pl.pallas_call(
        _make_ce_kernel(TM, TC, C),
        out_shape=jax.ShapeDtypeStruct((N, 1), jnp.float32),
        grid_spec=pltpu.PrefetchScalarGridSpec(
            num_scalar_prefetch=0,
            grid=grid,
            in_specs=[
                pl.BlockSpec((TM, TC), lambda i, j: (i, j)),   # logits tile
                pl.BlockSpec((TM, 1), lambda i, j: (i, 0)),    # targets
            ],
            out_specs=pl.BlockSpec((TM, 1), lambda i, j: (i, 0)),
            scratch_shapes=[
                pltpu.VMEM((TM, 1), jnp.float32),   # running max m
                pltpu.VMEM((TM, 1), jnp.float32),   # running exp-sum l
                pltpu.VMEM((TM, 1), jnp.float32),   # target-logit accum
            ],
        ),
        compiler_params=pltpu.CompilerParams(
            dimension_semantics=("parallel", "arbitrary"),
            vmem_limit_bytes=32 * 1024 * 1024,
        ),
        cost_estimate=pl.CostEstimate(
            flops=5 * N * C,
            transcendentals=N * C,
            bytes_accessed=N * C * dtype_bytes + 2 * N * 4,
        ),
    )(prediction, tgt2d)

    # Tiny final reduction + mean (fold 1/N as a multiply) in the wrapper so
    # the grid's row axis can shard across TensorCores.
    return jnp.sum(nll) * jnp.float32(1.0 / N)


if __name__ == "__main__":
    key = jax.random.PRNGKey(0)
    k1, k2 = jax.random.split(key)

    N, C = 8, 32  # batch, num_classes
    prediction = jax.random.normal(k1, (N, C), dtype=jnp.float32)
    # target comes in as (N, 1) to exercise the squeeze(1) path
    target = jax.random.randint(k2, (N, 1), 0, C, dtype=jnp.int32)

    loss = ce_loss(prediction, target)
    loss = jax.block_until_ready(loss)

    # reference check in plain JAX
    tgt1d = jnp.squeeze(target, axis=1)
    logp = jax.nn.log_softmax(prediction, axis=-1)
    ref = -jnp.mean(logp[jnp.arange(N), tgt1d])

    assert jnp.allclose(loss, ref, rtol=1e-5, atol=1e-5), (loss, ref)
    print("KERNEL_OK")
</pallas_src>

<mosaic_0001>
module attributes {stable_mosaic.version = 11 : i64} {
  func.func @kernel(%arg0: i32, %arg1: i32, %arg2: memref<8x32xf32, #tpu.memory_space<vmem>>, %arg3: memref<8x1xi32, #tpu.memory_space<vmem>>, %arg4: memref<8x1xf32, #tpu.memory_space<vmem>>, %arg5: memref<8x1xf32, #tpu.memory_space<vmem>>, %arg6: memref<8x1xf32, #tpu.memory_space<vmem>>, %arg7: memref<8x1xf32, #tpu.memory_space<vmem>>) attributes {dimension_semantics = [#tpu.dimension_semantics<parallel>, #tpu.dimension_semantics<arbitrary>], iteration_bounds = array<i64: 1, 1>, scalar_prefetch = 0 : i64, scratch_operands = 3 : i64, tpu.core_type = #tpu.core_type<tc>, window_params = [{transform_indices = @transform_0, window_bounds = array<i64: 8, 32>}, {transform_indices = @transform_1, window_bounds = array<i64: 8, 1>}, {transform_indices = @transform_2, window_bounds = array<i64: 8, 1>}]} {
    %c0_i32 = arith.constant 0 : i32
    %0 = arith.cmpi eq, %arg1, %c0_i32 : i32
    %1 = arith.extui %0 : i1 to i32
    %c0_i32_0 = arith.constant 0 : i32
    %2 = arith.cmpi ne, %1, %c0_i32_0 : i32
    scf.if %2 {
      %cst_21 = arith.constant 0xFF800000 : f32
      %37 = vector.broadcast %cst_21 : f32 to vector<8x1xf32>
      %c0_22 = arith.constant 0 : index
      %c0_23 = arith.constant 0 : index
      %38 = vector.load %arg5[%c0_22, %c0_23] : memref<8x1xf32, #tpu.memory_space<vmem>>, vector<8x1xf32>
      tpu.vector_store %arg5[%c0_22, %c0_23], %37 {strides = array<i32>} : memref<8x1xf32, #tpu.memory_space<vmem>>, vector<8x1xf32>,
      %cst_24 = arith.constant 0.000000e+00 : f32
      %39 = vector.broadcast %cst_24 : f32 to vector<8x1xf32>
      %c0_25 = arith.constant 0 : index
      %c0_26 = arith.constant 0 : index
      %40 = vector.load %arg6[%c0_25, %c0_26] : memref<8x1xf32, #tpu.memory_space<vmem>>, vector<8x1xf32>
      tpu.vector_store %arg6[%c0_25, %c0_26], %39 {strides = array<i32>} : memref<8x1xf32, #tpu.memory_space<vmem>>, vector<8x1xf32>,
      %cst_27 = arith.constant 0.000000e+00 : f32
      %41 = vector.broadcast %cst_27 : f32 to vector<8x1xf32>
      %c0_28 = arith.constant 0 : index
      %c0_29 = arith.constant 0 : index
      %42 = vector.load %arg7[%c0_28, %c0_29] : memref<8x1xf32, #tpu.memory_space<vmem>>, vector<8x1xf32>
      tpu.vector_store %arg7[%c0_28, %c0_29], %41 {strides = array<i32>} : memref<8x1xf32, #tpu.memory_space<vmem>>, vector<8x1xf32>,
    } else {
    }
    %c0 = arith.constant 0 : index
    %c0_1 = arith.constant 0 : index
    %3 = vector.load %arg2[%c0, %c0_1] : memref<8x32xf32, #tpu.memory_space<vmem>>, vector<8x32xf32>
    %c0_2 = arith.constant 0 : index
    %c0_3 = arith.constant 0 : index
    %4 = vector.load %arg3[%c0_2, %c0_3] : memref<8x1xi32, #tpu.memory_space<vmem>>, vector<8x1xi32>
    %c32_i32 = arith.constant 32 : i32
    %5 = arith.muli %arg1, %c32_i32 : i32
    %6 = tpu.iota {dimensions = array<i32: 1>} : vector<8x32xi32>
    %7 = vector.broadcast %5 : i32 to vector<8x32xi32>
    %8 = arith.addi %7, %6 : vector<8x32xi32>
    %cst = arith.constant dense<0xFF800000> : vector<8xf32>
    %9 = vector.multi_reduction <maximumf>, %3, %cst [1] : vector<8x32xf32> to vector<8xf32>
    %10 = vector.shape_cast %9 : vector<8xf32> to vector<8x1xf32>
    %c0_4 = arith.constant 0 : index
    %c0_5 = arith.constant 0 : index
    %11 = vector.load %arg5[%c0_4, %c0_5] : memref<8x1xf32, #tpu.memory_space<vmem>>, vector<8x1xf32>
    %12 = arith.maximumf %11, %10 : vector<8x1xf32>
    %13 = arith.subf %11, %12 : vector<8x1xf32>
    %14 = math.exp %13 : vector<8x1xf32>
    %c0_6 = arith.constant 0 : index
    %c0_7 = arith.constant 0 : index
    %15 = vector.load %arg6[%c0_6, %c0_7] : memref<8x1xf32, #tpu.memory_space<vmem>>, vector<8x1xf32>
    %16 = arith.mulf %15, %14 : vector<8x1xf32>
    %17 = vector.broadcast %12 : vector<8x1xf32> to vector<8x32xf32>
    %18 = arith.subf %3, %17 : vector<8x32xf32>
    %19 = math.exp %18 : vector<8x32xf32>
    %cst_8 = arith.constant dense<0.000000e+00> : vector<8xf32>
    %20 = vector.multi_reduction <add>, %19, %cst_8 [1] : vector<8x32xf32> to vector<8xf32>
    %21 = vector.shape_cast %20 : vector<8xf32> to vector<8x1xf32>
    %22 = arith.addf %16, %21 : vector<8x1xf32>
    %c0_9 = arith.constant 0 : index
    %c0_10 = arith.constant 0 : index
    %23 = vector.load %arg6[%c0_9, %c0_10] : memref<8x1xf32, #tpu.memory_space<vmem>>, vector<8x1xf32>
    tpu.vector_store %arg6[%c0_9, %c0_10], %22 {strides = array<i32>} : memref<8x1xf32, #tpu.memory_space<vmem>>, vector<8x1xf32>,
    %c0_11 = arith.constant 0 : index
    %c0_12 = arith.constant 0 : index
    %24 = vector.load %arg5[%c0_11, %c0_12] : memref<8x1xf32, #tpu.memory_space<vmem>>, vector<8x1xf32>
    tpu.vector_store %arg5[%c0_11, %c0_12], %12 {strides = array<i32>} : memref<8x1xf32, #tpu.memory_space<vmem>>, vector<8x1xf32>,
    %c0_13 = arith.constant 0 : index
    %c0_14 = arith.constant 0 : index
    %25 = vector.load %arg7[%c0_13, %c0_14] : memref<8x1xf32, #tpu.memory_space<vmem>>, vector<8x1xf32>
    %26 = vector.broadcast %4 : vector<8x1xi32> to vector<8x32xi32>
    %27 = arith.cmpi eq, %8, %26 : vector<8x32xi32>
    %cst_15 = arith.constant 0.000000e+00 : f32
    %28 = vector.broadcast %cst_15 : f32 to vector<8x32xf32>
    %29 = arith.select %27, %3, %28 : vector<8x32xi1>, vector<8x32xf32>
    %cst_16 = arith.constant dense<0.000000e+00> : vector<8xf32>
    %30 = vector.multi_reduction <add>, %29, %cst_16 [1] : vector<8x32xf32> to vector<8xf32>
    %31 = vector.shape_cast %30 : vector<8xf32> to vector<8x1xf32>
    %32 = arith.addf %25, %31 : vector<8x1xf32>
    %c0_17 = arith.constant 0 : index
    %c0_18 = arith.constant 0 : index
    %33 = vector.load %arg7[%c0_17, %c0_18] : memref<8x1xf32, #tpu.memory_space<vmem>>, vector<8x1xf32>
    tpu.vector_store %arg7[%c0_17, %c0_18], %32 {strides = array<i32>} : memref<8x1xf32, #tpu.memory_space<vmem>>, vector<8x1xf32>,
    %c0_i32_19 = arith.constant 0 : i32
    %34 = arith.cmpi eq, %arg1, %c0_i32_19 : i32
    %35 = arith.extui %34 : i1 to i32
    %c0_i32_20 = arith.constant 0 : i32
    %36 = arith.cmpi ne, %35, %c0_i32_20 : i32
    scf.if %36 {
      %c0_21 = arith.constant 0 : index
      %c0_22 = arith.constant 0 : index
      %37 = vector.load %arg6[%c0_21, %c0_22] : memref<8x1xf32, #tpu.memory_space<vmem>>, vector<8x1xf32>
      %38 = math.log %37 : vector<8x1xf32>
      %c0_23 = arith.constant 0 : index
      %c0_24 = arith.constant 0 : index
      %39 = vector.load %arg5[%c0_23, %c0_24] : memref<8x1xf32, #tpu.memory_space<vmem>>, vector<8x1xf32>
      %40 = arith.addf %38, %39 : vector<8x1xf32>
      %c0_25 = arith.constant 0 : index
      %c0_26 = arith.constant 0 : index
      %41 = vector.load %arg7[%c0_25, %c0_26] : memref<8x1xf32, #tpu.memory_space<vmem>>, vector<8x1xf32>
      %42 = arith.subf %40, %41 : vector<8x1xf32>
      %c0_27 = arith.constant 0 : index
      %c0_28 = arith.constant 0 : index
      %43 = vector.load %arg4[%c0_27, %c0_28] : memref<8x1xf32, #tpu.memory_space<vmem>>, vector<8x1xf32>
      tpu.vector_store %arg4[%c0_27, %c0_28], %42 {strides = array<i32>} : memref<8x1xf32, #tpu.memory_space<vmem>>, vector<8x1xf32>,
    } else {
    }
    return
  }
  func.func @transform_0(%arg0: i32, %arg1: i32) -> (i32, i32) {
    %c0_i32 = arith.constant 0 : i32
    return %arg0, %arg1 : i32, i32
  }
  func.func @transform_1(%arg0: i32, %arg1: i32) -> (i32, i32) {
    %c0_i32 = arith.constant 0 : i32
    %c0_i32_0 = arith.constant 0 : i32
    return %arg0, %c0_i32 : i32, i32
  }
  func.func @transform_2(%arg0: i32, %arg1: i32) -> (i32, i32) {
    %c0_i32 = arith.constant 0 : i32
    %c0_i32_0 = arith.constant 0 : i32
    return %arg0, %c0_i32 : i32, i32
  }
}

</mosaic_0001>

<llo_original>
// kernel: tpu_custom_call.1
$region0: #{tpu_custom_call.1}
  #allocation0 [shape = 'u32[]', space=smem, size = 0x4, offset = 0x4, fixed_abs, tag = 'smem constant byte address 0x4 - core index']
  #allocation1 [shape = 'u32[72,128]{1,0:T(1,128)}', space=vmem, size = 0x9000, scoped, tag = 'internal scratch']
  #allocation2 [shape = 'f32[8,1]{1,0:T(8,128)}', space=vmem, size = 0x1000, scoped, tag = 'scratch operand']
  #allocation3 [shape = 'f32[8,1]{1,0:T(8,128)}', space=vmem, size = 0x1000, scoped, tag = 'scratch operand']
  #allocation4 [shape = 'f32[8,1]{1,0:T(8,128)}', space=vmem, size = 0x1000, scoped, tag = 'scratch operand']
  %s0 = inlined_call_operand.vmem [shape: f32[8,32], index: 0, kind: input, shape index: {}]
  %s1 = inlined_call_operand.vmem [shape: s32[8,1], index: 1, kind: input, shape index: {}]
  %s2 = inlined_call_operand.vmem [shape: f32[8,1], index: 2, kind: output, shape index: {}]
  %s3 = sld [smem:[#allocation0]]
  $region26: #{tpu_custom_call.1} parent=0
    _
  %s5 = ssub.s32 1, %s3
  %s6 = scalar_select 0, %s5, %s3
  // Predicated region
  $region2: #{tpu_custom_call.1} parent=0 // pred_check
    _
  $region3: #{tpu_custom_call.1} parent=0 // pred_check_branch
    %8 = sbr.rel (0) target = $region5
  $region4: #{tpu_custom_call.1} parent=0 // pred_region
    _
  $region5: #{tpu_custom_call.1} parent=0 // pred_fallthru
    _
  // Predicated region
  $region6: #{tpu_custom_call.1} parent=0 // pred_check
    _
  $region7: #{tpu_custom_call.1} parent=0 // pred_check_branch
    %10 = sbr.rel (0) target = $region9
  $region8: #{tpu_custom_call.1} parent=0 // pred_region
    _
  $region9: #{tpu_custom_call.1} parent=0 // pred_fallthru
    _
  %p11 = scmp.eq.s32.totalorder 0, 0
  // Predicated region
  $region10: #{tpu_custom_call.1} parent=0 // pred_check
    %p12 = pneg %p11
  $region11: #{tpu_custom_call.1} parent=0 // pred_check_branch
    %14 = sbr.rel (%p12) target = $region13
  $region12: #{tpu_custom_call.1} parent=0 // pred_region
    %vm15 = vcmask 7168
    %16 = vst.msk [vmem:[#allocation2] sm:$0xff] %vm15, -inf
    %17 = vst.msk [vmem:[#allocation3] sm:$0xff] %vm15, 0.0
    %18 = vst.msk [vmem:[#allocation4] sm:$0xff] %vm15, 0.0
  $region13: #{tpu_custom_call.1} parent=0 // pred_fallthru
    _
  %v19 = vld [vmem:[%s0] sm:$0xff]
  %v20 = vld [vmem:[%s1] sm:$0xff]
  %s21 = smul.u32 0, 32
  %v22 = vlaneseq
  %v23 = vand.u32 %v22, 127
  %v24 = vstv %s21
  %v25 = vadd.s32 %v24, %v23
  %vm26 = vcmask 261120
  %v27 = vsel %vm26, %v19, -inf
  %28 = vmax.xlane.f32.xlu0 %v27
  %v29 = vpop.xlane.xlu0 %28
  %v30 = vld [vmem:[#allocation2] sm:$0xff]
  %v31 = vmax.f32 %v30, %v29
  %v32 = vsub.f32 %v30, %v31
  %v33 = vmul.f32 %v32, 1.442695
  %v34 = vpow.pop %v33
  %v35 = vld [vmem:[#allocation3] sm:$0xff]
  %v36 = vmul.f32 %v35, %v34
  %38 = vset.pattern.permute.xlu0 0
  %39 = vperm.xlu0 %38, %v31
  %v40 = vpop.permute.xlu0 %39
  %v42 = vsub.f32 %v19, %v40
  %v43 = vmul.f32 %v42, 1.442695
  %v44 = vpow.pop %v43
  %v45 = vsel %vm26, %v44, 0.0
  %46 = vadd.xlane.f32.xlu0 %v45
  %v47 = vpop.xlane.xlu0 %46
  %v48 = vadd.f32 %v36, %v47
  %vm49 = vcmask 7168
  %50 = vst.msk [vmem:[#allocation3] sm:$0xff] %vm49, %v48
  %51 = vst.msk [vmem:[#allocation2] sm:$0xff] %vm49, %v31
  %v52 = vld [vmem:[#allocation4] sm:$0xff]
  %53 = vset.pattern.permute.xlu0 0
  %54 = vperm.xlu0 %53, %v20
  %v55 = vpop.permute.xlu0 %54
  %vm56 = vcmp.eq.s32.totalorder %v25, %v55
  %v57 = vsel %vm56, %v19, 0.0
  %v58 = vsel %vm26, %v57, 0.0
  %59 = vadd.xlane.f32.xlu0 %v58
  %v60 = vpop.xlane.xlu0 %59
  %v61 = vadd.f32 %v52, %v60
  %62 = vst.msk [vmem:[#allocation4] sm:$0xff] %vm49, %v61
  // Predicated region
  $region14: #{tpu_custom_call.1} parent=0 // pred_check
    %p63 = pneg %p11
  $region15: #{tpu_custom_call.1} parent=0 // pred_check_branch
    %65 = sbr.rel (%p63) target = $region17
  $region16: #{tpu_custom_call.1} parent=0 // pred_region
    %v66 = vld [vmem:[#allocation3] sm:$0xff]
    %v67 = vlog2.pop %v66
    %v68 = vmul.f32 %v67, 0.6931472
    %v69 = vld [vmem:[#allocation2] sm:$0xff]
    %v70 = vadd.f32 %v68, %v69
    %v71 = vld [vmem:[#allocation4] sm:$0xff]
    %v72 = vsub.f32 %v70, %v71
    %73 = vst.msk [vmem:[%s2] sm:$0xff] %vm49, %v72
  $region17: #{tpu_custom_call.1} parent=0 // pred_fallthru
    _
  // Predicated region
  $region18: #{tpu_custom_call.1} parent=0 // pred_check
    _
  $region19: #{tpu_custom_call.1} parent=0 // pred_check_branch
    %75 = sbr.rel (0) target = $region21
  $region20: #{tpu_custom_call.1} parent=0 // pred_region
    _
  $region21: #{tpu_custom_call.1} parent=0 // pred_fallthru
    _
  // Predicated region
  $region22: #{tpu_custom_call.1} parent=0 // pred_check
    _
  $region23: #{tpu_custom_call.1} parent=0 // pred_check_branch
    %77 = sbr.rel (0) target = $region25
  $region24: #{tpu_custom_call.1} parent=0 // pred_region
    _
  $region25: #{tpu_custom_call.1} parent=0 // pred_fallthru
    _

</llo_original>
